<compile_context>
chip_gen: v7x
topology: tpu7x:2x2x1
jax: 0.10.0
libtpu: 0.0.40
codegen_flags: <defaults>
</compile_context>

<pallas_src>
import functools

import jax
import jax.numpy as jnp
import numpy as np
from jax import lax
from jax.experimental import pallas as pl
from jax.experimental.pallas import tpu as pltpu


def _round_up(x, m):
    return (x + m - 1) // m * m


def _triplet_block_kernel(anchors_ref,   # VMEM (TB, 1)  int32  anchor indices (-1 = padding)
                          acoord_ref,    # VMEM (TB, C)  f32    pre-gathered anchor coordinates
                          emb_ref,       # VMEM (Np, 2*Dp) bf16 [emb_hi | emb_lo] (resident)
                          coordt_ref,    # VMEM (C, Np)  f32    coordinates^T (resident)
                          loss_ref,      # VMEM (TB, 1)  f32    per-anchor hinge contribution
                          cnt_ref,       # VMEM (TB, 1)  f32    per-anchor validity (0/1)
                          *, margin, n_valid):
    tb = anchors_ref.shape[0]
    c_dim = coordt_ref.shape[0]
    n_pad = coordt_ref.shape[1]
    d_half = emb_ref.shape[1] // 2
    thresh2 = jnp.float32((margin * 100.0 / 2.0) ** 2)          # explicit f32 threshold

    a_col = anchors_ref[...]                                    # (TB, 1) int32
    lane = lax.broadcasted_iota(jnp.int32, (tb, n_pad), 1)      # candidate idx on lanes
    lane_f = lane.astype(jnp.float32)
    row_valid = jnp.logical_and(a_col >= 0, a_col < n_valid)    # False on padded anchors

    # Squared coordinate distance from each anchor to every candidate (lane-major f32).
    cdist2 = jnp.zeros((tb, n_pad), jnp.float32)
    for c in range(c_dim):                                      # C is tiny -> static unroll
        d_c = acoord_ref[:, c:c + 1] - coordt_ref[c:c + 1, :]   # (TB, Np)
        cdist2 = cdist2 + d_c * d_c

    is_anchor = lane == a_col
    base = jnp.logical_and(lane < n_valid, jnp.logical_not(is_anchor))
    near = cdist2 < thresh2
    pos_mask = jnp.logical_and(base, near)
    neg_mask = jnp.logical_and(base, jnp.logical_not(near))

    inf = jnp.float32(jnp.inf)
    sentinel = jnp.float32(n_pad)                               # never matches a real lane

    # Positive: coordinate-nearest; first index wins on exact ties (matches strict '<').
    pos_vals = jnp.where(pos_mask, cdist2, inf)
    pos_min = jnp.min(pos_vals, axis=1, keepdims=True)          # (TB, 1)
    pos_valid = pos_min < inf
    pos_pick = jnp.logical_and(pos_mask, pos_vals == pos_min)
    pos_sel = jnp.min(jnp.where(pos_pick, lane_f, sentinel), axis=1, keepdims=True)

    # Negative: coordinate-farthest; first index wins on exact ties (matches strict '>').
    neg_vals = jnp.where(neg_mask, cdist2, -inf)
    neg_max = jnp.max(neg_vals, axis=1, keepdims=True)
    neg_valid = neg_max > -inf
    neg_pick = jnp.logical_and(neg_mask, neg_vals == neg_max)
    neg_sel = jnp.min(jnp.where(neg_pick, lane_f, sentinel), axis=1, keepdims=True)

    valid = jnp.logical_and(row_valid, jnp.logical_and(pos_valid, neg_valid))   # (TB, 1)

    # Fused gather selector: +1 on the anchor lane, -1 on the pos/neg lane, 0 elsewhere.
    one = jnp.float32(1.0)
    m_one = jnp.float32(-1.0)
    zero = jnp.float32(0.0)
    sel_pos = jnp.where(is_anchor, one, jnp.where(lane_f == pos_sel, m_one, zero))
    sel_neg = jnp.where(is_anchor, one, jnp.where(lane_f == neg_sel, m_one, zero))
    sel = jnp.concatenate([sel_pos, sel_neg], axis=0).astype(jnp.bfloat16)      # (2TB, Np)

    # Single native bf16 MXU matmul gathers (e_a - e_p) and (e_a - e_n) for the hi and
    # lo halves at once; recombine the halves with one lane-aligned f32 add.
    g = jnp.dot(sel, emb_ref[...], preferred_element_type=jnp.float32)          # (2TB, 2Dp)
    diff = g[:, :d_half] + g[:, d_half:]                                        # (2TB, Dp)

    dist = jnp.sqrt(jnp.sum(diff * diff, axis=1, keepdims=True))                # 2*TB sqrts
    pos_d = dist[:tb]
    neg_d = dist[tb:]

    contrib = jnp.maximum(pos_d - neg_d + jnp.float32(margin), 0.0)
    loss_ref[...] = jnp.where(valid, contrib, zero)
    cnt_ref[...] = valid.astype(jnp.float32)


def custom_triplet_margin_loss(embeddings, coordinates, anchor_idx, margin=0.1,
                               anchor_block=256):
    """embeddings: [N, D] f32, coordinates: [N, C] f32, anchor_idx: [T] int32."""
    emb = embeddings.astype(jnp.float32)
    coords = coordinates.astype(jnp.float32)
    anchors = anchor_idx.astype(jnp.int32)

    n, d = emb.shape
    c = coords.shape[1]
    t = anchors.shape[0]

    n_pad = _round_up(n, 128)          # candidates live on lanes -> lane-dense (TB, N) math
    d_pad = _round_up(d, 128)          # lane-dense MXU output and row reductions

    # hi/lo bf16 split precomputed once; zero-padding doesn't change norms or selection.
    emb_p = jnp.pad(emb, ((0, n_pad - n), (0, d_pad - d)))
    emb_hi = emb_p.astype(jnp.bfloat16)
    emb_lo = (emb_p - emb_hi.astype(jnp.float32)).astype(jnp.bfloat16)
    emb_cat = jnp.concatenate([emb_hi, emb_lo], axis=1)           # (Np, 2*Dp) bf16

    coord_t = jnp.pad(coords, ((0, n_pad - n), (0, 0))).T         # (C, Np) f32
    acoords = jnp.take(coords, anchors, axis=0)                   # (T, C) anchor coords

    # Anchors per block: keep the ~16 live (TB, Np) f32 temporaries well under VMEM
    # even on v7x (64 MiB); small N -> larger blocks, large N -> smaller blocks.
    temp_budget = 16 << 20
    tb_cap = max(8, temp_budget // max(1, 16 * n_pad * 4))
    tb = _round_up(min(min(anchor_block, tb_cap), max(t, 1)), 8)
    t_pad = _round_up(t, tb)

    anchors_p = jnp.pad(anchors, (0, t_pad - t),
                        constant_values=-1).reshape(t_pad, 1)     # -1 = padding sentinel
    acoords_p = jnp.pad(acoords, ((0, t_pad - t), (0, 0)))

    # Explicit scoped-VMEM budget: residents (double-buffered) + per-block temporaries.
    resident = n_pad * (2 * d_pad) * 2 + c * n_pad * 4
    temps = 16 * tb * n_pad * 4 + 4 * (2 * tb) * (2 * d_pad) * 4
    vmem_limit = int(min(max(2 * resident + temps + (4 << 20), 32 << 20), 120 << 20))
    # TODO(synk): on v7x, pipeline_mode=pl.Buffered(1) on the two resident inputs would
    # drop their second buffer; omitted here to stay conservative on API availability.

    kernel = functools.partial(_triplet_block_kernel, margin=float(margin), n_valid=n)
    per_loss, per_cnt = pl.pallas_call(
        kernel,
        out_shape=(jax.ShapeDtypeStruct((t_pad, 1), jnp.float32),
                   jax.ShapeDtypeStruct((t_pad, 1), jnp.float32)),
        grid_spec=pltpu.PrefetchScalarGridSpec(
            num_scalar_prefetch=0,
            grid=(t_pad // tb,),
            in_specs=[
                pl.BlockSpec((tb, 1), lambda i: (i, 0)),          # anchor indices
                pl.BlockSpec((tb, c), lambda i: (i, 0)),          # anchor coordinates
                pl.BlockSpec((n_pad, 2 * d_pad), lambda i: (0, 0)),  # [emb_hi|emb_lo] resident
                pl.BlockSpec((c, n_pad), lambda i: (0, 0)),       # coordinates^T resident
            ],
            out_specs=[
                pl.BlockSpec((tb, 1), lambda i: (i, 0)),          # per-anchor hinge
                pl.BlockSpec((tb, 1), lambda i: (i, 0)),          # per-anchor validity
            ],
        ),
        compiler_params=pltpu.CompilerParams(
            dimension_semantics=("parallel",),                    # independent blocks (2 TCs on v7x)
            vmem_limit_bytes=vmem_limit),
    )(anchors_p, acoords_p, emb_cat, coord_t)

    cnt = jnp.sum(per_cnt)
    total = jnp.sum(per_loss)
    return jnp.where(cnt > 0.0, total / jnp.maximum(cnt, 1.0), 0.0)


def reference_loss(embeddings, coordinates, anchor_idx, margin=0.1):
    """Pure numpy port of the PyTorch module (given the same anchor draws)."""
    emb = np.asarray(embeddings)
    coords = np.asarray(coordinates)
    anchors = np.asarray(anchor_idx)
    margin_s = margin * 100 / 2
    triplets = []
    for a in anchors:
        a = int(a)
        pos_idx, neg_idx = None, None
        min_pos, max_neg = float("inf"), float("-inf")
        for idx in range(len(coords)):
            if idx == a:
                continue
            diff = float(np.linalg.norm(coords[a] - coords[idx]))
            if diff < margin_s:
                if diff < min_pos:
                    min_pos = diff
                    pos_idx = idx
            elif diff > max_neg:
                max_neg = diff
                neg_idx = idx
        if pos_idx is not None and neg_idx is not None:
            triplets.append((a, pos_idx, neg_idx))
    loss = 0.0
    for a, p, ng in triplets:
        pd = float(np.linalg.norm(emb[a] - emb[p]))
        nd = float(np.linalg.norm(emb[a] - emb[ng]))
        loss += max(pd - nd + margin, 0.0)
    if len(triplets) != 0:
        loss /= len(triplets)
    return loss


if __name__ == "__main__":
    key = jax.random.PRNGKey(0)
    k_emb, k_coord, k_anchor = jax.random.split(key, 3)

    N, D, C = 8, 32, 2       # N samples, embedding dim D, coordinate dim C
    embeddings = jax.random.normal(k_emb, (N, D), dtype=jnp.float32)
    # Coordinates spread over [0, 20)^2 so both near (< margin*100/2 = 5) and
    # far (>= 5) neighbors exist for most anchors.
    coordinates = jax.random.uniform(k_coord, (N, C), dtype=jnp.float32) * 20.0
    # Deterministic replacement for the torch.randint anchor draw inside
    # select_triplets (num_triplets = len(embeddings)).
    anchor_idx = jax.random.randint(k_anchor, (N,), 0, N, dtype=jnp.int32)

    loss = custom_triplet_margin_loss(embeddings, coordinates, anchor_idx, margin=0.1)
    loss = jax.block_until_ready(loss)

    ref = reference_loss(embeddings, coordinates, anchor_idx, margin=0.1)
    assert abs(float(loss) - float(ref)) < 1e-3, (float(loss), float(ref))

    print("KERNEL_OK")
</pallas_src>

<mosaic_0001>
module attributes {stable_mosaic.version = 11 : i64} {
  func.func @_triplet_block_kernel(%arg0: i32, %arg1: memref<8x1xi32, #tpu.memory_space<vmem>>, %arg2: memref<8x2xf32, #tpu.memory_space<vmem>>, %arg3: memref<128x256xbf16, #tpu.memory_space<vmem>>, %arg4: memref<2x128xf32, #tpu.memory_space<vmem>>, %arg5: memref<8x1xf32, #tpu.memory_space<vmem>>, %arg6: memref<8x1xf32, #tpu.memory_space<vmem>>) attributes {dimension_semantics = [#tpu.dimension_semantics<parallel>], iteration_bounds = array<i64: 1>, scalar_prefetch = 0 : i64, scratch_operands = 0 : i64, tpu.core_type = #tpu.core_type<tc>, window_params = [{transform_indices = @transform_0, window_bounds = array<i64: 8, 1>}, {transform_indices = @transform_1, window_bounds = array<i64: 8, 2>}, {pipeline_mode = #tpu.pipeline_mode<synchronous>, transform_indices = @transform_2, window_bounds = array<i64: 128, 256>}, {pipeline_mode = #tpu.pipeline_mode<synchronous>, transform_indices = @transform_3, window_bounds = array<i64: 2, 128>}, {transform_indices = @transform_4, window_bounds = array<i64: 8, 1>}, {transform_indices = @transform_5, window_bounds = array<i64: 8, 1>}]} {
    %c0 = arith.constant 0 : index
    %c0_0 = arith.constant 0 : index
    %0 = vector.load %arg1[%c0, %c0_0] : memref<8x1xi32, #tpu.memory_space<vmem>>, vector<8x1xi32>
    %1 = tpu.iota {dimensions = array<i32: 1>} : vector<8x128xi32>
    %2 = arith.sitofp %1 : vector<8x128xi32> to vector<8x128xf32>
    %c0_i32 = arith.constant 0 : i32
    %3 = vector.broadcast %c0_i32 : i32 to vector<8x1xi32>
    %4 = arith.cmpi sge, %0, %3 : vector<8x1xi32>
    %c8_i32 = arith.constant 8 : i32
    %5 = vector.broadcast %c8_i32 : i32 to vector<8x1xi32>
    %6 = arith.cmpi slt, %0, %5 : vector<8x1xi32>
    %7 = arith.andi %4, %6 : vector<8x1xi1>
    %cst = arith.constant 0.000000e+00 : f32
    %8 = vector.broadcast %cst : f32 to vector<8x128xf32>
    %c0_1 = arith.constant 0 : index
    %c0_2 = arith.constant 0 : index
    %9 = vector.load %arg2[%c0_1, %c0_2] : memref<8x2xf32, #tpu.memory_space<vmem>>, vector<8x1xf32>
    %c0_3 = arith.constant 0 : index
    %c0_4 = arith.constant 0 : index
    %10 = vector.load %arg4[%c0_3, %c0_4] : memref<2x128xf32, #tpu.memory_space<vmem>>, vector<1x128xf32>
    %11 = vector.broadcast %9 : vector<8x1xf32> to vector<8x128xf32>
    %12 = vector.broadcast %10 : vector<1x128xf32> to vector<8x128xf32>
    %13 = arith.subf %11, %12 : vector<8x128xf32>
    %14 = arith.mulf %13, %13 : vector<8x128xf32>
    %15 = arith.addf %8, %14 : vector<8x128xf32>
    %c0_5 = arith.constant 0 : index
    %c1 = arith.constant 1 : index
    %16 = vector.load %arg2[%c0_5, %c1] : memref<8x2xf32, #tpu.memory_space<vmem>>, vector<8x1xf32>
    %c1_6 = arith.constant 1 : index
    %c0_7 = arith.constant 0 : index
    %17 = vector.load %arg4[%c1_6, %c0_7] : memref<2x128xf32, #tpu.memory_space<vmem>>, vector<1x128xf32>
    %18 = vector.broadcast %16 : vector<8x1xf32> to vector<8x128xf32>
    %19 = vector.broadcast %17 : vector<1x128xf32> to vector<8x128xf32>
    %20 = arith.subf %18, %19 : vector<8x128xf32>
    %21 = arith.mulf %20, %20 : vector<8x128xf32>
    %22 = arith.addf %15, %21 : vector<8x128xf32>
    %23 = vector.broadcast %0 : vector<8x1xi32> to vector<8x128xi32>
    %24 = arith.cmpi eq, %1, %23 : vector<8x128xi32>
    %c8_i32_8 = arith.constant 8 : i32
    %25 = vector.broadcast %c8_i32_8 : i32 to vector<8x128xi32>
    %26 = arith.cmpi slt, %1, %25 : vector<8x128xi32>
    %cst_9 = arith.constant dense<true> : vector<8x128xi1>
    %27 = arith.xori %24, %cst_9 : vector<8x128xi1>
    %28 = arith.andi %26, %27 : vector<8x128xi1>
    %cst_10 = arith.constant 2.500000e+01 : f32
    %29 = vector.broadcast %cst_10 : f32 to vector<8x128xf32>
    %30 = arith.cmpf olt, %22, %29 : vector<8x128xf32>
    %31 = arith.andi %28, %30 : vector<8x128xi1>
    %cst_11 = arith.constant dense<true> : vector<8x128xi1>
    %32 = arith.xori %30, %cst_11 : vector<8x128xi1>
    %33 = arith.andi %28, %32 : vector<8x128xi1>
    %cst_12 = arith.constant 0x7F800000 : f32
    %34 = vector.broadcast %cst_12 : f32 to vector<8x128xf32>
    %35 = arith.select %31, %22, %34 : vector<8x128xi1>, vector<8x128xf32>
    %cst_13 = arith.constant dense<0x7F800000> : vector<8xf32>
    %36 = vector.multi_reduction <minimumf>, %35, %cst_13 [1] : vector<8x128xf32> to vector<8xf32>
    %37 = vector.shape_cast %36 : vector<8xf32> to vector<8x1xf32>
    %cst_14 = arith.constant 0x7F800000 : f32
    %38 = vector.broadcast %cst_14 : f32 to vector<8x1xf32>
    %39 = arith.cmpf olt, %37, %38 : vector<8x1xf32>
    %40 = vector.broadcast %37 : vector<8x1xf32> to vector<8x128xf32>
    %41 = arith.cmpf oeq, %35, %40 : vector<8x128xf32>
    %42 = arith.andi %31, %41 : vector<8x128xi1>
    %cst_15 = arith.constant 1.280000e+02 : f32
    %43 = vector.broadcast %cst_15 : f32 to vector<8x128xf32>
    %44 = arith.select %42, %2, %43 : vector<8x128xi1>, vector<8x128xf32>
    %cst_16 = arith.constant dense<0x7F800000> : vector<8xf32>
    %45 = vector.multi_reduction <minimumf>, %44, %cst_16 [1] : vector<8x128xf32> to vector<8xf32>
    %46 = vector.shape_cast %45 : vector<8xf32> to vector<8x1xf32>
    %cst_17 = arith.constant 0.000000e+00 : f32
    %cst_18 = arith.constant 0x7F800000 : f32
    %47 = arith.subf %cst_17, %cst_18 : f32
    %48 = vector.broadcast %47 : f32 to vector<8x128xf32>
    %49 = arith.select %33, %22, %48 : vector<8x128xi1>, vector<8x128xf32>
    %cst_19 = arith.constant dense<0xFF800000> : vector<8xf32>
    %50 = vector.multi_reduction <maximumf>, %49, %cst_19 [1] : vector<8x128xf32> to vector<8xf32>
    %51 = vector.shape_cast %50 : vector<8xf32> to vector<8x1xf32>
    %cst_20 = arith.constant 0.000000e+00 : f32
    %cst_21 = arith.constant 0x7F800000 : f32
    %52 = arith.subf %cst_20, %cst_21 : f32
    %53 = vector.broadcast %52 : f32 to vector<8x1xf32>
    %54 = arith.cmpf ogt, %51, %53 : vector<8x1xf32>
    %55 = vector.broadcast %51 : vector<8x1xf32> to vector<8x128xf32>
    %56 = arith.cmpf oeq, %49, %55 : vector<8x128xf32>
    %57 = arith.andi %33, %56 : vector<8x128xi1>
    %cst_22 = arith.constant 1.280000e+02 : f32
    %58 = vector.broadcast %cst_22 : f32 to vector<8x128xf32>
    %59 = arith.select %57, %2, %58 : vector<8x128xi1>, vector<8x128xf32>
    %cst_23 = arith.constant dense<0x7F800000> : vector<8xf32>
    %60 = vector.multi_reduction <minimumf>, %59, %cst_23 [1] : vector<8x128xf32> to vector<8xf32>
    %61 = vector.shape_cast %60 : vector<8xf32> to vector<8x1xf32>
    %62 = arith.andi %39, %54 : vector<8x1xi1>
    %63 = arith.andi %7, %62 : vector<8x1xi1>
    %64 = vector.broadcast %46 : vector<8x1xf32> to vector<8x128xf32>
    %65 = arith.cmpf oeq, %2, %64 : vector<8x128xf32>
    %cst_24 = arith.constant -1.000000e+00 : f32
    %cst_25 = arith.constant 0.000000e+00 : f32
    %66 = vector.broadcast %cst_24 : f32 to vector<8x128xf32>
    %67 = vector.broadcast %cst_25 : f32 to vector<8x128xf32>
    %68 = arith.select %65, %66, %67 : vector<8x128xi1>, vector<8x128xf32>
    %cst_26 = arith.constant 1.000000e+00 : f32
    %69 = vector.broadcast %cst_26 : f32 to vector<8x128xf32>
    %70 = arith.select %24, %69, %68 : vector<8x128xi1>, vector<8x128xf32>
    %71 = vector.broadcast %61 : vector<8x1xf32> to vector<8x128xf32>
    %72 = arith.cmpf oeq, %2, %71 : vector<8x128xf32>
    %cst_27 = arith.constant -1.000000e+00 : f32
    %cst_28 = arith.constant 0.000000e+00 : f32
    %73 = vector.broadcast %cst_27 : f32 to vector<8x128xf32>
    %74 = vector.broadcast %cst_28 : f32 to vector<8x128xf32>
    %75 = arith.select %72, %73, %74 : vector<8x128xi1>, vector<8x128xf32>
    %cst_29 = arith.constant 1.000000e+00 : f32
    %76 = vector.broadcast %cst_29 : f32 to vector<8x128xf32>
    %77 = arith.select %24, %76, %75 : vector<8x128xi1>, vector<8x128xf32>
    %78 = tpu.concatenate %70, %77 in 0 : vector<8x128xf32>, vector<8x128xf32> -> vector<16x128xf32>
    %79 = arith.truncf %78 : vector<16x128xf32> to vector<16x128xbf16>
    %c0_30 = arith.constant 0 : index
    %c0_31 = arith.constant 0 : index
    %80 = vector.load %arg3[%c0_30, %c0_31] : memref<128x256xbf16, #tpu.memory_space<vmem>>, vector<128x256xbf16>
    %cst_32 = arith.constant dense<0.000000e+00> : vector<16x256xf32>
    %81 = tpu.matmul %79, %80, %cst_32 {dimension_numbers = #tpu.dot_dimension_numbers<[1], [0], [0], [1], [0, 0, 1, 1], [], []>} : vector<16x128xbf16>, vector<128x256xbf16>, vector<16x256xf32> -> vector<16x256xf32>
    %82 = vector.extract_strided_slice %81 {offsets = [0, 0], sizes = [16, 128], strides = [1, 1]} : vector<16x256xf32> to vector<16x128xf32>
    %83 = vector.extract_strided_slice %81 {offsets = [0, 128], sizes = [16, 128], strides = [1, 1]} : vector<16x256xf32> to vector<16x128xf32>
    %84 = arith.addf %82, %83 : vector<16x128xf32>
    %85 = arith.mulf %84, %84 : vector<16x128xf32>
    %cst_33 = arith.constant dense<0.000000e+00> : vector<16xf32>
    %86 = vector.multi_reduction <add>, %85, %cst_33 [1] : vector<16x128xf32> to vector<16xf32>
    %87 = vector.shape_cast %86 : vector<16xf32> to vector<16x1xf32>
    %88 = math.sqrt %87 : vector<16x1xf32>
    %89 = vector.extract_strided_slice %88 {offsets = [0, 0], sizes = [8, 1], strides = [1, 1]} : vector<16x1xf32> to vector<8x1xf32>
    %90 = vector.extract_strided_slice %88 {offsets = [8, 0], sizes = [8, 1], strides = [1, 1]} : vector<16x1xf32> to vector<8x1xf32>
    %91 = arith.subf %89, %90 : vector<8x1xf32>
    %cst_34 = arith.constant 1.000000e-01 : f32
    %92 = vector.broadcast %cst_34 : f32 to vector<8x1xf32>
    %93 = arith.addf %91, %92 : vector<8x1xf32>
    %cst_35 = arith.constant 0.000000e+00 : f32
    %94 = vector.broadcast %cst_35 : f32 to vector<8x1xf32>
    %95 = arith.maximumf %93, %94 : vector<8x1xf32>
    %cst_36 = arith.constant 0.000000e+00 : f32
    %96 = vector.broadcast %cst_36 : f32 to vector<8x1xf32>
    %97 = arith.select %63, %95, %96 : vector<8x1xi1>, vector<8x1xf32>
    %c0_37 = arith.constant 0 : index
    %c0_38 = arith.constant 0 : index
    %98 = vector.load %arg5[%c0_37, %c0_38] : memref<8x1xf32, #tpu.memory_space<vmem>>, vector<8x1xf32>
    tpu.vector_store %arg5[%c0_37, %c0_38], %97 {strides = array<i32>} : memref<8x1xf32, #tpu.memory_space<vmem>>, vector<8x1xf32>,
    %99 = arith.extui %63 : vector<8x1xi1> to vector<8x1xi32>
    %100 = arith.sitofp %99 : vector<8x1xi32> to vector<8x1xf32>
    %c0_39 = arith.constant 0 : index
    %c0_40 = arith.constant 0 : index
    %101 = vector.load %arg6[%c0_39, %c0_40] : memref<8x1xf32, #tpu.memory_space<vmem>>, vector<8x1xf32>
    tpu.vector_store %arg6[%c0_39, %c0_40], %100 {strides = array<i32>} : memref<8x1xf32, #tpu.memory_space<vmem>>, vector<8x1xf32>,
    return
  }
  func.func @transform_0(%arg0: i32) -> (i32, i32) {
    %c0_i32 = arith.constant 0 : i32
    %c0_i32_0 = arith.constant 0 : i32
    return %arg0, %c0_i32 : i32, i32
  }
  func.func @transform_1(%arg0: i32) -> (i32, i32) {
    %c0_i32 = arith.constant 0 : i32
    %c0_i32_0 = arith.constant 0 : i32
    return %arg0, %c0_i32 : i32, i32
  }
  func.func @transform_2(%arg0: i32) -> (i32, i32) {
    %c0_i32 = arith.constant 0 : i32
    %c0_i32_0 = arith.constant 0 : i32
    %c0_i32_1 = arith.constant 0 : i32
    return %c0_i32, %c0_i32_0 : i32, i32
  }
  func.func @transform_3(%arg0: i32) -> (i32, i32) {
    %c0_i32 = arith.constant 0 : i32
    %c0_i32_0 = arith.constant 0 : i32
    %c0_i32_1 = arith.constant 0 : i32
    return %c0_i32, %c0_i32_0 : i32, i32
  }
  func.func @transform_4(%arg0: i32) -> (i32, i32) {
    %c0_i32 = arith.constant 0 : i32
    %c0_i32_0 = arith.constant 0 : i32
    return %arg0, %c0_i32 : i32, i32
  }
  func.func @transform_5(%arg0: i32) -> (i32, i32) {
    %c0_i32 = arith.constant 0 : i32
    %c0_i32_0 = arith.constant 0 : i32
    return %arg0, %c0_i32 : i32, i32
  }
}

</mosaic_0001>

<llo_original>
// kernel: tpu_custom_call.1
$region0: #{tpu_custom_call.1}
  #allocation0 [shape = 'u32[]', space=smem, size = 0x4, offset = 0x4, fixed_abs, tag = 'smem constant byte address 0x4 - core index']
  #allocation1 [shape = 'u32[144,128]{1,0:T(1,128)}', space=vmem, size = 0x12000, scoped, tag = 'internal scratch']
  %s0 = inlined_call_operand.vmem [shape: s32[8,1], index: 0, kind: input, shape index: {}]
  %s1 = inlined_call_operand.vmem [shape: f32[8,2], index: 1, kind: input, shape index: {}]
  %s2 = inlined_call_operand.hbm [shape: bf16[128,256], index: 2, kind: input, shape index: {}]
  %s3 = inlined_call_operand.vmem [shape: f32[2,128], index: 3, kind: input, shape index: {}]
  %s4 = inlined_call_operand.vmem [shape: f32[8,1], index: 4, kind: output, shape index: {0}]
  %s5 = inlined_call_operand.vmem [shape: f32[8,1], index: 5, kind: output, shape index: {1}]
  %6 = xla_tuple %s4, %s5
  %s7 = sld [smem:[#allocation0]]
  $region38: #{tpu_custom_call.1} parent=0
    _
  %s9 = ssub.s32 1, %s7
  %s10 = scalar_select 0, %s9, %s7
  $region1: #{tpu_custom_call.1} parent=0
    #allocation2 [shape = 'u8[65536]{0}', space=vmem, size = 0x10000, scoped, tag = 'input window, operand 2, single buffered']
    #allocation3 [shape = 's32[1]{0}', space=sflag, size = 0x4, scoped, tag = 'scoped memory for tpu_custom_call.1']
    %11 = vsyncpa [#allocation3], 0
    // Predicated region
    $region2: #{tpu_custom_call.1} parent=1 // pred_check
      _
    $region3: #{tpu_custom_call.1} parent=1 // pred_check_branch
      %13 = sbr.rel (0) target = $region5
    $region4: #{tpu_custom_call.1} parent=1 // pred_region
      _
    $region5: #{tpu_custom_call.1} parent=1 // pred_fallthru
      _
    // Predicated region
    $region6: #{tpu_custom_call.1} parent=1 // pred_check
      _
    $region7: #{tpu_custom_call.1} parent=1 // pred_check_branch
      %15 = sbr.rel (0) target = $region9
    $region8: #{tpu_custom_call.1} parent=1 // pred_region
      _
    $region9: #{tpu_custom_call.1} parent=1 // pred_fallthru
      _
    // Predicated region
    $region10: #{tpu_custom_call.1} parent=1 // pred_check
      _
    $region11: #{tpu_custom_call.1} parent=1 // pred_check_branch
      %17 = sbr.rel (0) target = $region13
    $region12: #{tpu_custom_call.1} parent=1 // pred_region
      %s19 = ssub.s32 2048, 2048
      %20 = vsyncadd [#allocation3], %s19
      %s21 = sshll.u32 [#allocation2], 4
      %s22 = int_to_ptr.vmem [resolvable:$true] %s21
      %27 = dma.hbm_to_vmem [thread:$0]  %s2, 2048, %s22, [#allocation3], 128, 128, 8
    $region13: #{tpu_custom_call.1} parent=1 // pred_fallthru
      _
    // Predicated region
    $region14: #{tpu_custom_call.1} parent=1 // pred_check
      _
    $region15: #{tpu_custom_call.1} parent=1 // pred_check_branch
      %29 = sbr.rel (0) target = $region17
    $region16: #{tpu_custom_call.1} parent=1 // pred_region
      _
    $region17: #{tpu_custom_call.1} parent=1 // pred_fallthru
      _
    // Predicated region
    $region18: #{tpu_custom_call.1} parent=1 // pred_check
      _
    $region19: #{tpu_custom_call.1} parent=1 // pred_check_branch
      %31 = sbr.rel (0) target = $region21
    $region20: #{tpu_custom_call.1} parent=1 // pred_region
      %32 = dma.done [#allocation3], 2048
    $region21: #{tpu_custom_call.1} parent=1 // pred_fallthru
      _
    %v34 = vld [vmem:[%s0] sm:$0xff]
    %v35 = vlaneseq
    %v36 = vand.u32 %v35, 127
    %v37 = vcvt.s32.f32 %v36
    %vm38 = vcmp.ge.s32.totalorder %v34, 0
    %vm39 = vcmp.lt.s32.totalorder %v34, 8
    %vm40 = vmand %vm38, %vm39
    %v41 = vld [vmem:[%s1] sm:$0xff]
    %v42 = vld [vmem:[%s3] sm:$0x1]
    %44 = vset.pattern.permute.xlu0 0
    %45 = vperm.xlu0 %44, %v41
    %v46 = vpop.permute.xlu0 %45
    %v48 = vlaneseq
    %v49 = vshrl.u32 %v48, 7
    %v50 = vsub.s32 0, %v49
    %v51 = vrot.slane %v42, %v50
    %v52 = vsub.f32 %v46, %v51
    %v53 = vmul.f32 %v52, %v52
    %v54 = vadd.f32 %v53, 0.0
    %v55 = vld [vmem:[%s3 + $0x1] sm:$0x1]
    %56 = vset.pattern.permute.xlu0 1
    %57 = vperm.xlu0 %56, %v41
    %v58 = vpop.permute.xlu0 %57
    %v60 = vlaneseq
    %v61 = vshrl.u32 %v60, 7
    %v62 = vsub.s32 0, %v61
    %v63 = vrot.slane %v55, %v62
    %v64 = vsub.f32 %v58, %v63
    %v65 = vmul.f32 %v64, %v64
    %v66 = vadd.f32 %v54, %v65
    %67 = vset.pattern.permute.xlu0 0
    %68 = vperm.xlu0 %67, %v34
    %v69 = vpop.permute.xlu0 %68
    %vm70 = vcmp.eq.s32.totalorder %v36, %v69
    %vm71 = vcmp.lt.s32.totalorder %v36, 8
    %vm72 = vmxor %vm70, 1
    %vm73 = vmand %vm71, %vm72
    %vm74 = vcmp.lt.f32.partialorder %v66, 25.0
    %vm75 = vmand %vm73, %vm74
    %vm76 = vmxor %vm74, 1
    %vm77 = vmand %vm73, %vm76
    %v78 = vsel %vm75, %v66, inf
    %79 = vmin.xlane.f32.xlu0 %v78
    %v80 = vpop.xlane.xlu0 %79
    %vm81 = vcmp.lt.f32.partialorder %v80, inf
    %vm82 = vcmp.eq.f32.partialorder %v78, %v80
    %vm83 = vmand %vm75, %vm82
    %v84 = vsel %vm83, %v37, 128.0
    %85 = vmin.xlane.f32.xlu0 %v84
    %v86 = vpop.xlane.xlu0 %85
    %v87 = vsel %vm77, %v66, -inf
    %88 = vmax.xlane.f32.xlu0 %v87
    %v89 = vpop.xlane.xlu0 %88
    %vm90 = vcmp.gt.f32.partialorder %v89, -inf
    %vm91 = vcmp.eq.f32.partialorder %v87, %v89
    %vm92 = vmand %vm77, %vm91
    %v93 = vsel %vm92, %v37, 128.0
    %94 = vmin.xlane.f32.xlu0 %v93
    %v95 = vpop.xlane.xlu0 %94
    %vm96 = vmand %vm81, %vm90
    %vm97 = vmand %vm40, %vm96
    %vm98 = vcmp.eq.f32.partialorder %v37, %v86
    %v99 = vsel %vm98, -1.0, 0.0
    %v100 = vsel %vm70, 1.0, %v99
    %vm101 = vcmp.eq.f32.partialorder %v37, %v95
    %v102 = vsel %vm101, -1.0, 0.0
    %v103 = vsel %vm70, 1.0, %v102
    %v104 = vpack.c.bf16 %v103, %v100
    %v105 = vld [vmem:[#allocation2] sm:$0xff]
    %v106 = vld [vmem:[#allocation2 + $0x8] sm:$0xff]
    %v107 = vld [vmem:[#allocation2 + $0x10] sm:$0xff]
    %v108 = vld [vmem:[#allocation2 + $0x18] sm:$0xff]
    %v109 = vld [vmem:[#allocation2 + $0x20] sm:$0xff]
    %v110 = vld [vmem:[#allocation2 + $0x28] sm:$0xff]
    %v111 = vld [vmem:[#allocation2 + $0x30] sm:$0xff]
    %v112 = vld [vmem:[#allocation2 + $0x38] sm:$0xff]
    %v113 = vld [vmem:[#allocation2 + $0x40] sm:$0xff]
    %v114 = vld [vmem:[#allocation2 + $0x48] sm:$0xff]
    %v115 = vld [vmem:[#allocation2 + $0x50] sm:$0xff]
    %v116 = vld [vmem:[#allocation2 + $0x58] sm:$0xff]
    %v117 = vld [vmem:[#allocation2 + $0x60] sm:$0xff]
    %v118 = vld [vmem:[#allocation2 + $0x68] sm:$0xff]
    %v119 = vld [vmem:[#allocation2 + $0x70] sm:$0xff]
    %v120 = vld [vmem:[#allocation2 + $0x78] sm:$0xff]
    %v137 = vunpack.c.l.b16 %v105
    %v138 = vunpack.c.h.b16 %v105
    %v139 = vunpack.c.l.b16 %v106
    %v140 = vunpack.c.h.b16 %v106
    %v141 = vunpack.c.l.b16 %v107
    %v142 = vunpack.c.h.b16 %v107
    %v143 = vunpack.c.l.b16 %v108
    %v144 = vunpack.c.h.b16 %v108
    %v145 = vunpack.c.l.b16 %v109
    %v146 = vunpack.c.h.b16 %v109
    %v147 = vunpack.c.l.b16 %v110
    %v148 = vunpack.c.h.b16 %v110
    %v149 = vunpack.c.l.b16 %v111
    %v150 = vunpack.c.h.b16 %v111
    %v151 = vunpack.c.l.b16 %v112
    %v152 = vunpack.c.h.b16 %v112
    %v153 = vunpack.c.l.b16 %v113
    %v154 = vunpack.c.h.b16 %v113
    %v155 = vunpack.c.l.b16 %v114
    %v156 = vunpack.c.h.b16 %v114
    %v157 = vunpack.c.l.b16 %v115
    %v158 = vunpack.c.h.b16 %v115
    %v159 = vunpack.c.l.b16 %v116
    %v160 = vunpack.c.h.b16 %v116
    %v161 = vunpack.c.l.b16 %v117
    %v162 = vunpack.c.h.b16 %v117
    %v163 = vunpack.c.l.b16 %v118
    %v164 = vunpack.c.h.b16 %v118
    %v165 = vunpack.c.l.b16 %v119
    %v166 = vunpack.c.h.b16 %v119
    %v167 = vunpack.c.l.b16 %v120
    %v168 = vunpack.c.h.b16 %v120
    %v169 = vpack.c.b16 %v139, %v137
    %v170 = vpack.c.b16 %v140, %v138
    %v171 = vpack.c.b16 %v143, %v141
    %v172 = vpack.c.b16 %v144, %v142
    %v173 = vpack.c.b16 %v147, %v145
    %v174 = vpack.c.b16 %v148, %v146
    %v175 = vpack.c.b16 %v151, %v149
    %v176 = vpack.c.b16 %v152, %v150
    %v177 = vpack.c.b16 %v155, %v153
    %v178 = vpack.c.b16 %v156, %v154
    %v179 = vpack.c.b16 %v159, %v157
    %v180 = vpack.c.b16 %v160, %v158
    %v181 = vpack.c.b16 %v163, %v161
    %v182 = vpack.c.b16 %v164, %v162
    %v183 = vpack.c.b16 %v167, %v165
    %v184 = vpack.c.b16 %v168, %v166
    %201 = vmatprep.subr.bf16.mxu0 %v170
    %202 = vmatpush1.bf16.msra.mxu0 %v169
    %203 = vmatprep.subr.bf16.mxu0 %v172
    %204 = vmatpush1.bf16.msra.mxu0 %v171
    %205 = vmatprep.subr.bf16.mxu0 %v174
    %206 = vmatpush1.bf16.msra.mxu0 %v173
    %207 = vmatprep.subr.bf16.mxu0 %v176
    %208 = vmatpush1.bf16.msra.mxu0 %v175
    %209 = vmatprep.subr.bf16.mxu0 %v178
    %210 = vmatpush1.bf16.msra.mxu0 %v177
    %211 = vmatprep.subr.bf16.mxu0 %v180
    %212 = vmatpush1.bf16.msra.mxu0 %v179
    %213 = vmatprep.subr.bf16.mxu0 %v182
    %214 = vmatpush1.bf16.msra.mxu0 %v181
    %215 = vmatprep.subr.bf16.mxu0 %v184
    %216 = vmatpush1.bf16.msra.mxu0 %v183
    %217 = vmatprep.subr.bf16.mxu0 0
    %218 = vmatpush1.bf16.msra.mxu0 0
    %219 = vmatprep.subr.bf16.mxu0 0
    %220 = vmatpush1.bf16.msra.mxu0 0
    %221 = vmatprep.subr.bf16.mxu0 0
    %222 = vmatpush1.bf16.msra.mxu0 0
    %223 = vmatprep.subr.bf16.mxu0 0
    %224 = vmatpush1.bf16.msra.mxu0 0
    %225 = vmatprep.subr.bf16.mxu0 0
    %226 = vmatpush1.bf16.msra.mxu0 0
    %227 = vmatprep.subr.bf16.mxu0 0
    %228 = vmatpush1.bf16.msra.mxu0 0
    %229 = vmatprep.subr.bf16.mxu0 0
    %230 = vmatpush1.bf16.msra.mxu0 0
    %231 = vmatprep.subr.bf16.mxu0 0
    %232 = vmatpush1.bf16.msra.mxu0 0
    %233 = vmatprep.mubr.bf16.mxu0 0
    %234 = vmatmul.mubr.bf16.gmra.mrb[0].mxu0 %v104
    %v235 = vpop.f32.mrb[0].mxu0
    %v236 = vadd.f32 0.0, %v235
    %v237 = vpop.f32.mrb[0].mxu0
    %v238 = vadd.f32 0.0, %v237
    %v239 = vpop.f32.mrb[0].mxu0
    %v240 = vadd.f32 0.0, %v239
    %v241 = vpop.f32.mrb[0].mxu0
    %v242 = vadd.f32 0.0, %v241
    %243 = vdwg.mxu0
    %v244 = vadd.f32 %v236, %v238
    %v245 = vadd.f32 %v240, %v242
    %v246 = vmul.f32 %v244, %v244
    %v247 = vmul.f32 %v245, %v245
    %248 = vadd.xlane.f32.xlu0 %v246
    %v249 = vpop.xlane.xlu0 %248
    %250 = vadd.xlane.f32.xlu0 %v247
    %v251 = vpop.xlane.xlu0 %250
    %v252 = vrsqrt.pop %v249
    %v253 = vmul.f32 %v249, %v252
    %vm254 = vcmp.eq.f32.partialorder %v249, inf
    %v255 = vsel %vm254, %v249, %v253
    %vm256 = vcmp.eq.f32.partialorder %v249, 0.0
    %v257 = vand.u32 %v249, 2147483648
    %v258 = vsel %vm256, %v257, %v255
    %v259 = vrsqrt.pop %v251
    %v260 = vmul.f32 %v251, %v259
    %vm261 = vcmp.eq.f32.partialorder %v251, inf
    %v262 = vsel %vm261, %v251, %v260
    %vm263 = vcmp.eq.f32.partialorder %v251, 0.0
    %v264 = vand.u32 %v251, 2147483648
    %v265 = vsel %vm263, %v264, %v262
    %v266 = vsub.f32 %v258, %v265
    %v267 = vadd.f32 %v266, 0.1
    %v268 = vmax.f32 %v267, 0.0
    %v269 = vsel %vm97, %v268, 0.0
    %vm270 = vcmask 7168
    %271 = vst.msk [vmem:[%s4] sm:$0xff] %vm270, %v269
    %v272 = vsel %vm97, 1, 0
    %v273 = vcvt.s32.f32 %v272
    %274 = vst.msk [vmem:[%s5] sm:$0xff] %vm270, %v273
    // Predicated region
    $region22: #{tpu_custom_call.1} parent=1 // pred_check
      _
    $region23: #{tpu_custom_call.1} parent=1 // pred_check_branch
      %276 = sbr.rel (0) target = $region25
    $region24: #{tpu_custom_call.1} parent=1 // pred_region
      _
    $region25: #{tpu_custom_call.1} parent=1 // pred_fallthru
      _
    // Predicated region
    $region26: #{tpu_custom_call.1} parent=1 // pred_check
      _
    $region27: #{tpu_custom_call.1} parent=1 // pred_check_branch
      %278 = sbr.rel (0) target = $region29
    $region28: #{tpu_custom_call.1} parent=1 // pred_region
      _
    $region29: #{tpu_custom_call.1} parent=1 // pred_fallthru
      _
    // Predicated region
    $region30: #{tpu_custom_call.1} parent=1 // pred_check
      _
    $region31: #{tpu_custom_call.1} parent=1 // pred_check_branch
      %280 = sbr.rel (0) target = $region33
    $region32: #{tpu_custom_call.1} parent=1 // pred_region
      _
    $region33: #{tpu_custom_call.1} parent=1 // pred_fallthru
      _
    // Predicated region
    $region34: #{tpu_custom_call.1} parent=1 // pred_check
      _
    $region35: #{tpu_custom_call.1} parent=1 // pred_check_branch
      %282 = sbr.rel (0) target = $region37
    $region36: #{tpu_custom_call.1} parent=1 // pred_region
      _
    $region37: #{tpu_custom_call.1} parent=1 // pred_fallthru
      _
    %283 = vsyncpa [#allocation3], 1

</llo_original>
